<compile_context>
chip_gen: v7x
topology: tpu7x:2x2x1
jax: 0.10.0
libtpu: 0.0.40
codegen_flags: <defaults>
</compile_context>

<pallas_src>
import math

import jax
import jax.numpy as jnp
from jax import lax
from jax.experimental import pallas as pl
from jax.experimental.pallas import tpu as pltpu

_C1 = 0.01 ** 2
_C2 = 0.03 ** 2
# Constants rescaled for unscaled 3x3 sums (S = 9 * mu): 81 = 9^2.
_A1 = 81.0 * _C1
_A2 = 81.0 * _C2


def _make_ssim_kernel(rows_per_plane: int):
    """Kernel over a 2-D (block_rows, lanes) tile holding whole planes/strips."""

    def kernel(x_ref, y_ref, o_ref):
        rows, lanes = x_ref.shape
        x = x_ref[...].astype(jnp.float32)
        y = y_ref[...].astype(jnp.float32)

        # Boundary masks (computed once, shared by all five pools).
        col = lax.broadcasted_iota(jnp.int32, (rows, lanes), 1)
        first_col = col == 0
        last_col = col == lanes - 1
        row = lax.broadcasted_iota(jnp.int32, (rows, lanes), 0) % rows_per_plane
        first_row = row == 0
        last_row = row == rows_per_plane - 1

        def pool9(a):
            # Unscaled 3x3 sum with reflect(1) boundaries, separable:
            # 1x3 lane pass then 3x1 sublane pass.  Shifts ride the XLU via
            # pltpu.roll; the roll wrap-around at plane edges is replaced by
            # the reflected neighbor with one select per edge
            # (reflect: a[-1] -> a[1], a[n] -> a[n-2]).
            left = pltpu.roll(a, shift=1, axis=1)            # a[., c-1]
            right = pltpu.roll(a, shift=lanes - 1, axis=1)   # a[., c+1]
            h = (a + jnp.where(first_col, right, left)
                 + jnp.where(last_col, left, right))
            up = pltpu.roll(h, shift=1, axis=0)              # h[r-1, .]
            down = pltpu.roll(h, shift=rows - 1, axis=0)     # h[r+1, .]
            return (h + jnp.where(first_row, down, up)
                    + jnp.where(last_row, up, down))

        sx = pool9(x)                      # 9 * mu_x
        sy = pool9(y)                      # 9 * mu_y

        cross2 = sx * sy
        cross2 = cross2 + cross2           # 2 * (9 mu_x)(9 mu_y)
        # numerator = 81^2 * SSIM_n ; pooled products consumed immediately.
        num = (cross2 + _A1) * (18.0 * pool9(x * y) - cross2 + _A2)

        sq = sx * sx + sy * sy
        # denominator = 81^2 * SSIM_d
        den = (sq + _A1) * (9.0 * (pool9(x * x) + pool9(y * y)) - sq + _A2)

        inv = pl.reciprocal(den, approx=True)   # EUP vrcp
        inv = inv * (2.0 - den * inv)           # one Newton step -> ~f32 accuracy
        res = (1.0 - num * inv) * 0.5
        o_ref[...] = jnp.clip(res, 0.0, 1.0).astype(o_ref.dtype)

    return kernel


def _vmem_capacity_bytes():
    try:
        cap = int(pltpu.get_tpu_info().vmem_capacity_bytes)
        if cap > 0:
            return cap
    except Exception:
        pass
    return 64 * 1024 * 1024   # conservative fallback (v7x per-TC VMEM)


def _choose_group(n_planes, rows_per_plane, rows_fit, min_steps=8):
    """Planes per grid step: must divide n_planes, keep block rows % 8 == 0,
    fit the VMEM row budget, and prefer >= min_steps grid steps so both v7x
    TensorCores get a few pipelined steps each."""
    m = 8 // math.gcd(rows_per_plane, 8)   # smallest G making (G*rows) % 8 == 0
    valid = [d for d in range(1, n_planes + 1)
             if n_planes % d == 0 and d % m == 0
             and d * rows_per_plane <= rows_fit]
    if not valid:
        return None
    prefer_cap = max(1, n_planes // min_steps)
    preferred = [d for d in valid if d <= prefer_cap]
    return max(preferred) if preferred else min(valid)


def ssim_pallas(x, y, *, h_tile=None):
    """SSIM loss map between two NCHW images (matches the PyTorch SSIM module).

    h_tile: optional forced strip height for the H-strip path (testing /
            tuning); by default strips are only used when a whole plane does
            not fit the VMEM budget (or its rows cannot be 8-aligned).
    """
    assert x.shape == y.shape and x.ndim == 4 and x.dtype == y.dtype
    B, C, H, W = x.shape
    assert H >= 2 and W >= 2, "ReflectionPad2d(1) requires H >= 2 and W >= 2"
    dtype = x.dtype
    P = B * C
    x = x.reshape(P, H, W)
    y = y.reshape(P, H, W)

    # --- lane axis: keep a multiple of 128 so rolls and stores are aligned and
    # lane-dense.  When W is misaligned, reflect-pad by 1 and zero-pad to the
    # next multiple of 128; the kernel's own column reflect then only touches
    # columns that get cropped afterwards.
    # TODO(synk): no W tiling — extremely wide rows rely on the raised VMEM limit.
    if W % 128 == 0:
        Wp, col0 = W, 0
    else:
        Wp, col0 = ((W + 2 + 127) // 128) * 128, 1

        def _pad_cols(a):
            parts = [a[:, :, 1:2], a, a[:, :, W - 2:W - 1]]
            if Wp > W + 2:
                parts.append(jnp.zeros((P, H, Wp - (W + 2)), dtype))
            return jnp.concatenate(parts, axis=2)

        x, y = _pad_cols(x), _pad_cols(y)

    # --- VMEM budget & block sizing -----------------------------------------
    cap = _vmem_capacity_bytes()
    budget = (cap * 3) // 4                          # ~48 MiB v7x, ~96 MiB v5e/v6e
    vmem_limit = max(32 << 20, min(cap - (4 << 20), budget + budget // 3))
    itemsize = jnp.dtype(dtype).itemsize
    # Per block row: x/y/out double-buffered (input dtype) + ~10 live f32 temps.
    bytes_per_row = Wp * (3 * 2 * itemsize + 10 * 4)
    rows_fit = max(8, budget // bytes_per_row)

    # --- plane / strip decomposition -----------------------------------------
    G = None if h_tile is not None else _choose_group(P, H, rows_fit)
    if G is not None:
        # Direct path: whole (H, Wp) planes, G planes per grid step.
        rows_per_plane, n_planes, S = H, P, 0
        x2 = x.reshape(P * H, Wp)
        y2 = y.reshape(P * H, Wp)
    else:
        # H-strip path: overlapping strips with a +-1-row halo built in the
        # wrapper (strip rows a multiple of 8); halo rows are cropped after
        # the kernel, so its own row reflect never leaks into kept rows.
        # TODO(synk): a manual-DMA halo (memory_space=pl.ANY + make_async_copy)
        # would avoid the wrapper-side strip copy for very large planes.
        rows_fit8 = max(8, (rows_fit // 8) * 8)
        if h_tile is None:
            rows_per_plane = min(rows_fit8, ((H + 2 + 7) // 8) * 8)
        else:
            rows_per_plane = max(8, ((max(1, h_tile) + 2 + 7) // 8) * 8)
        h_eff = rows_per_plane - 2
        S = -(-H // h_eff)                           # ceil
        ap_rows = S * h_eff + 2

        def _to_strips(a):
            ap = jnp.concatenate([a[:, 1:2], a, a[:, H - 2:H - 1]], axis=1)
            if ap_rows > H + 2:
                ap = jnp.concatenate(
                    [ap, jnp.zeros((P, ap_rows - (H + 2), Wp), dtype)], axis=1)
            strips = jnp.stack(
                [ap[:, s * h_eff: s * h_eff + rows_per_plane] for s in range(S)],
                axis=1)                              # (P, S, rows_per_plane, Wp)
            return strips.reshape(P * S * rows_per_plane, Wp)

        n_planes = P * S
        x2, y2 = _to_strips(x), _to_strips(y)
        G = _choose_group(n_planes, rows_per_plane, rows_fit) or 1

    block_rows = G * rows_per_plane
    grid = (n_planes // G,)

    out2 = pl.pallas_call(
        _make_ssim_kernel(rows_per_plane),
        out_shape=jax.ShapeDtypeStruct((n_planes * rows_per_plane, Wp), dtype),
        grid_spec=pltpu.PrefetchScalarGridSpec(
            num_scalar_prefetch=0,
            grid=grid,
            in_specs=[
                pl.BlockSpec((block_rows, Wp), lambda i: (i, 0)),
                pl.BlockSpec((block_rows, Wp), lambda i: (i, 0)),
            ],
            out_specs=pl.BlockSpec((block_rows, Wp), lambda i: (i, 0)),
        ),
        compiler_params=pltpu.CompilerParams(
            dimension_semantics=("parallel",),
            vmem_limit_bytes=int(vmem_limit),
        ),
    )(x2, y2)

    if S:
        out = out2.reshape(P, S, rows_per_plane, Wp)[:, :, 1:1 + h_eff, :]
        out = out.reshape(P, S * h_eff, Wp)[:, :H, :]
    else:
        out = out2.reshape(P, H, Wp)
    return out[:, :, col0:col0 + W].reshape(B, C, H, W)


def ssim_reference(x, y):
    """Pure-JAX reference (reduce_window based) for verification."""
    x = x.astype(jnp.float32)
    y = y.astype(jnp.float32)
    pad = ((0, 0), (0, 0), (1, 1), (1, 1))
    xp = jnp.pad(x, pad, mode="reflect")
    yp = jnp.pad(y, pad, mode="reflect")

    def avg_pool(a):
        s = lax.reduce_window(a, 0.0, lax.add,
                              window_dimensions=(1, 1, 3, 3),
                              window_strides=(1, 1, 1, 1),
                              padding="VALID")
        return s / 9.0

    mu_x = avg_pool(xp)
    mu_y = avg_pool(yp)
    sigma_x = avg_pool(xp * xp) - mu_x ** 2
    sigma_y = avg_pool(yp * yp) - mu_y ** 2
    sigma_xy = avg_pool(xp * yp) - mu_x * mu_y
    n = (2 * mu_x * mu_y + _C1) * (2 * sigma_xy + _C2)
    d = (mu_x ** 2 + mu_y ** 2 + _C1) * (sigma_x + sigma_y + _C2)
    return jnp.clip((1 - n / d) / 2, 0.0, 1.0)


if __name__ == "__main__":
    key = jax.random.PRNGKey(0)
    kx, ky = jax.random.split(key)
    B, C, H, W = 2, 4, 16, 16
    x = jax.random.uniform(kx, (B, C, H, W), dtype=jnp.float32)
    y = jax.random.uniform(ky, (B, C, H, W), dtype=jnp.float32)

    ref = ssim_reference(x, y)

    # Direct (whole-plane) path.
    out = jax.block_until_ready(ssim_pallas(x, y))
    assert out.shape == (B, C, H, W) and out.dtype == x.dtype
    assert jnp.allclose(out, ref, atol=5e-5, rtol=1e-5), "mismatch vs reference"

    # Exercise the H-strip (large-plane) path with a forced small strip.
    out_s = jax.block_until_ready(ssim_pallas(x, y, h_tile=6))
    assert jnp.allclose(out_s, ref, atol=5e-5, rtol=1e-5), "strip path mismatch"

    print("KERNEL_OK")
</pallas_src>

<mosaic_0001>
module attributes {stable_mosaic.version = 11 : i64} {
  func.func @kernel(%arg0: i32, %arg1: memref<16x128xf32, #tpu.memory_space<vmem>>, %arg2: memref<16x128xf32, #tpu.memory_space<vmem>>, %arg3: memref<16x128xf32, #tpu.memory_space<vmem>>) attributes {dimension_semantics = [#tpu.dimension_semantics<parallel>], iteration_bounds = array<i64: 8>, scalar_prefetch = 0 : i64, scratch_operands = 0 : i64, tpu.core_type = #tpu.core_type<tc>, window_params = [{transform_indices = @transform_0, window_bounds = array<i64: 16, 128>}, {transform_indices = @transform_1, window_bounds = array<i64: 16, 128>}, {transform_indices = @transform_2, window_bounds = array<i64: 16, 128>}]} {
    %c0 = arith.constant 0 : index
    %c0_0 = arith.constant 0 : index
    %0 = vector.load %arg1[%c0, %c0_0] : memref<16x128xf32, #tpu.memory_space<vmem>>, vector<16x128xf32>
    %c0_1 = arith.constant 0 : index
    %c0_2 = arith.constant 0 : index
    %1 = vector.load %arg2[%c0_1, %c0_2] : memref<16x128xf32, #tpu.memory_space<vmem>>, vector<16x128xf32>
    %2 = tpu.iota {dimensions = array<i32: 1>} : vector<16x128xi32>
    %c0_i32 = arith.constant 0 : i32
    %3 = vector.broadcast %c0_i32 : i32 to vector<16x128xi32>
    %4 = arith.cmpi eq, %2, %3 : vector<16x128xi32>
    %c127_i32 = arith.constant 127 : i32
    %5 = vector.broadcast %c127_i32 : i32 to vector<16x128xi32>
    %6 = arith.cmpi eq, %2, %5 : vector<16x128xi32>
    %7 = tpu.iota {dimensions = array<i32: 0>} : vector<16x128xi32>
    %c16_i32 = arith.constant 16 : i32
    %c0_i32_3 = arith.constant 0 : i32
    %8 = arith.cmpi eq, %c16_i32, %c0_i32_3 : i32
    %c1_i32 = arith.constant 1 : i32
    %9 = arith.select %8, %c1_i32, %c16_i32 : i32
    %10 = vector.broadcast %9 : i32 to vector<16x128xi32>
    %11 = arith.remsi %7, %10 : vector<16x128xi32>
    %c0_i32_4 = arith.constant 0 : i32
    %12 = vector.broadcast %c0_i32_4 : i32 to vector<16x128xi32>
    %13 = arith.cmpi ne, %11, %12 : vector<16x128xi32>
    %c0_i32_5 = arith.constant 0 : i32
    %14 = vector.broadcast %c0_i32_5 : i32 to vector<16x128xi32>
    %15 = arith.cmpi slt, %11, %14 : vector<16x128xi32>
    %c0_i32_6 = arith.constant 0 : i32
    %16 = arith.cmpi slt, %9, %c0_i32_6 : i32
    %17 = vector.broadcast %16 : i1 to vector<16x128xi1>
    %18 = vector.broadcast %17 : vector<16x128xi1> to vector<16x128xi1>
    %19 = arith.xori %15, %18 : vector<16x128xi1>
    %20 = arith.andi %19, %13 : vector<16x128xi1>
    %21 = vector.broadcast %9 : i32 to vector<16x128xi32>
    %22 = arith.addi %11, %21 : vector<16x128xi32>
    %23 = arith.select %20, %22, %11 : vector<16x128xi1>, vector<16x128xi32>
    %c0_i32_7 = arith.constant 0 : i32
    %24 = vector.broadcast %c0_i32_7 : i32 to vector<16x128xi32>
    %25 = arith.cmpi eq, %23, %24 : vector<16x128xi32>
    %c15_i32 = arith.constant 15 : i32
    %26 = vector.broadcast %c15_i32 : i32 to vector<16x128xi32>
    %27 = arith.cmpi eq, %23, %26 : vector<16x128xi32>
    %c1_i32_8 = arith.constant 1 : i32
    %28 = tpu.dynamic_rotate %0 by %c1_i32_8 dim 1 : vector<16x128xf32>, i32 -> vector<16x128xf32>
    %c127_i32_9 = arith.constant 127 : i32
    %29 = tpu.dynamic_rotate %0 by %c127_i32_9 dim 1 : vector<16x128xf32>, i32 -> vector<16x128xf32>
    %30 = arith.select %4, %29, %28 : vector<16x128xi1>, vector<16x128xf32>
    %31 = arith.addf %0, %30 : vector<16x128xf32>
    %32 = arith.select %6, %28, %29 : vector<16x128xi1>, vector<16x128xf32>
    %33 = arith.addf %31, %32 : vector<16x128xf32>
    %c1_i32_10 = arith.constant 1 : i32
    %34 = tpu.dynamic_rotate %33 by %c1_i32_10 dim 0 : vector<16x128xf32>, i32 -> vector<16x128xf32>
    %c15_i32_11 = arith.constant 15 : i32
    %35 = tpu.dynamic_rotate %33 by %c15_i32_11 dim 0 : vector<16x128xf32>, i32 -> vector<16x128xf32>
    %36 = arith.select %25, %35, %34 : vector<16x128xi1>, vector<16x128xf32>
    %37 = arith.addf %33, %36 : vector<16x128xf32>
    %38 = arith.select %27, %34, %35 : vector<16x128xi1>, vector<16x128xf32>
    %39 = arith.addf %37, %38 : vector<16x128xf32>
    %c1_i32_12 = arith.constant 1 : i32
    %40 = tpu.dynamic_rotate %1 by %c1_i32_12 dim 1 : vector<16x128xf32>, i32 -> vector<16x128xf32>
    %c127_i32_13 = arith.constant 127 : i32
    %41 = tpu.dynamic_rotate %1 by %c127_i32_13 dim 1 : vector<16x128xf32>, i32 -> vector<16x128xf32>
    %42 = arith.select %4, %41, %40 : vector<16x128xi1>, vector<16x128xf32>
    %43 = arith.addf %1, %42 : vector<16x128xf32>
    %44 = arith.select %6, %40, %41 : vector<16x128xi1>, vector<16x128xf32>
    %45 = arith.addf %43, %44 : vector<16x128xf32>
    %c1_i32_14 = arith.constant 1 : i32
    %46 = tpu.dynamic_rotate %45 by %c1_i32_14 dim 0 : vector<16x128xf32>, i32 -> vector<16x128xf32>
    %c15_i32_15 = arith.constant 15 : i32
    %47 = tpu.dynamic_rotate %45 by %c15_i32_15 dim 0 : vector<16x128xf32>, i32 -> vector<16x128xf32>
    %48 = arith.select %25, %47, %46 : vector<16x128xi1>, vector<16x128xf32>
    %49 = arith.addf %45, %48 : vector<16x128xf32>
    %50 = arith.select %27, %46, %47 : vector<16x128xi1>, vector<16x128xf32>
    %51 = arith.addf %49, %50 : vector<16x128xf32>
    %52 = arith.mulf %39, %51 : vector<16x128xf32>
    %53 = arith.addf %52, %52 : vector<16x128xf32>
    %cst = arith.constant 8.100000e-03 : f32
    %54 = vector.broadcast %cst : f32 to vector<16x128xf32>
    %55 = arith.addf %53, %54 : vector<16x128xf32>
    %56 = arith.mulf %0, %1 : vector<16x128xf32>
    %c1_i32_16 = arith.constant 1 : i32
    %57 = tpu.dynamic_rotate %56 by %c1_i32_16 dim 1 : vector<16x128xf32>, i32 -> vector<16x128xf32>
    %c127_i32_17 = arith.constant 127 : i32
    %58 = tpu.dynamic_rotate %56 by %c127_i32_17 dim 1 : vector<16x128xf32>, i32 -> vector<16x128xf32>
    %59 = arith.select %4, %58, %57 : vector<16x128xi1>, vector<16x128xf32>
    %60 = arith.addf %56, %59 : vector<16x128xf32>
    %61 = arith.select %6, %57, %58 : vector<16x128xi1>, vector<16x128xf32>
    %62 = arith.addf %60, %61 : vector<16x128xf32>
    %c1_i32_18 = arith.constant 1 : i32
    %63 = tpu.dynamic_rotate %62 by %c1_i32_18 dim 0 : vector<16x128xf32>, i32 -> vector<16x128xf32>
    %c15_i32_19 = arith.constant 15 : i32
    %64 = tpu.dynamic_rotate %62 by %c15_i32_19 dim 0 : vector<16x128xf32>, i32 -> vector<16x128xf32>
    %65 = arith.select %25, %64, %63 : vector<16x128xi1>, vector<16x128xf32>
    %66 = arith.addf %62, %65 : vector<16x128xf32>
    %67 = arith.select %27, %63, %64 : vector<16x128xi1>, vector<16x128xf32>
    %68 = arith.addf %66, %67 : vector<16x128xf32>
    %cst_20 = arith.constant 1.800000e+01 : f32
    %69 = vector.broadcast %cst_20 : f32 to vector<16x128xf32>
    %70 = arith.mulf %69, %68 : vector<16x128xf32>
    %71 = arith.subf %70, %53 : vector<16x128xf32>
    %cst_21 = arith.constant 7.290000e-02 : f32
    %72 = vector.broadcast %cst_21 : f32 to vector<16x128xf32>
    %73 = arith.addf %71, %72 : vector<16x128xf32>
    %74 = arith.mulf %55, %73 : vector<16x128xf32>
    %75 = arith.mulf %39, %39 : vector<16x128xf32>
    %76 = arith.mulf %51, %51 : vector<16x128xf32>
    %77 = arith.addf %75, %76 : vector<16x128xf32>
    %cst_22 = arith.constant 8.100000e-03 : f32
    %78 = vector.broadcast %cst_22 : f32 to vector<16x128xf32>
    %79 = arith.addf %77, %78 : vector<16x128xf32>
    %80 = arith.mulf %0, %0 : vector<16x128xf32>
    %c1_i32_23 = arith.constant 1 : i32
    %81 = tpu.dynamic_rotate %80 by %c1_i32_23 dim 1 : vector<16x128xf32>, i32 -> vector<16x128xf32>
    %c127_i32_24 = arith.constant 127 : i32
    %82 = tpu.dynamic_rotate %80 by %c127_i32_24 dim 1 : vector<16x128xf32>, i32 -> vector<16x128xf32>
    %83 = arith.select %4, %82, %81 : vector<16x128xi1>, vector<16x128xf32>
    %84 = arith.addf %80, %83 : vector<16x128xf32>
    %85 = arith.select %6, %81, %82 : vector<16x128xi1>, vector<16x128xf32>
    %86 = arith.addf %84, %85 : vector<16x128xf32>
    %c1_i32_25 = arith.constant 1 : i32
    %87 = tpu.dynamic_rotate %86 by %c1_i32_25 dim 0 : vector<16x128xf32>, i32 -> vector<16x128xf32>
    %c15_i32_26 = arith.constant 15 : i32
    %88 = tpu.dynamic_rotate %86 by %c15_i32_26 dim 0 : vector<16x128xf32>, i32 -> vector<16x128xf32>
    %89 = arith.select %25, %88, %87 : vector<16x128xi1>, vector<16x128xf32>
    %90 = arith.addf %86, %89 : vector<16x128xf32>
    %91 = arith.select %27, %87, %88 : vector<16x128xi1>, vector<16x128xf32>
    %92 = arith.addf %90, %91 : vector<16x128xf32>
    %93 = arith.mulf %1, %1 : vector<16x128xf32>
    %c1_i32_27 = arith.constant 1 : i32
    %94 = tpu.dynamic_rotate %93 by %c1_i32_27 dim 1 : vector<16x128xf32>, i32 -> vector<16x128xf32>
    %c127_i32_28 = arith.constant 127 : i32
    %95 = tpu.dynamic_rotate %93 by %c127_i32_28 dim 1 : vector<16x128xf32>, i32 -> vector<16x128xf32>
    %96 = arith.select %4, %95, %94 : vector<16x128xi1>, vector<16x128xf32>
    %97 = arith.addf %93, %96 : vector<16x128xf32>
    %98 = arith.select %6, %94, %95 : vector<16x128xi1>, vector<16x128xf32>
    %99 = arith.addf %97, %98 : vector<16x128xf32>
    %c1_i32_29 = arith.constant 1 : i32
    %100 = tpu.dynamic_rotate %99 by %c1_i32_29 dim 0 : vector<16x128xf32>, i32 -> vector<16x128xf32>
    %c15_i32_30 = arith.constant 15 : i32
    %101 = tpu.dynamic_rotate %99 by %c15_i32_30 dim 0 : vector<16x128xf32>, i32 -> vector<16x128xf32>
    %102 = arith.select %25, %101, %100 : vector<16x128xi1>, vector<16x128xf32>
    %103 = arith.addf %99, %102 : vector<16x128xf32>
    %104 = arith.select %27, %100, %101 : vector<16x128xi1>, vector<16x128xf32>
    %105 = arith.addf %103, %104 : vector<16x128xf32>
    %106 = arith.addf %92, %105 : vector<16x128xf32>
    %cst_31 = arith.constant 9.000000e+00 : f32
    %107 = vector.broadcast %cst_31 : f32 to vector<16x128xf32>
    %108 = arith.mulf %107, %106 : vector<16x128xf32>
    %109 = arith.subf %108, %77 : vector<16x128xf32>
    %cst_32 = arith.constant 7.290000e-02 : f32
    %110 = vector.broadcast %cst_32 : f32 to vector<16x128xf32>
    %111 = arith.addf %109, %110 : vector<16x128xf32>
    %112 = arith.mulf %79, %111 : vector<16x128xf32>
    %113 = tpu.reciprocal %112 {approx = true} : vector<16x128xf32> -> vector<16x128xf32>
    %114 = arith.mulf %112, %113 : vector<16x128xf32>
    %cst_33 = arith.constant 2.000000e+00 : f32
    %115 = vector.broadcast %cst_33 : f32 to vector<16x128xf32>
    %116 = arith.subf %115, %114 : vector<16x128xf32>
    %117 = arith.mulf %113, %116 : vector<16x128xf32>
    %118 = arith.mulf %74, %117 : vector<16x128xf32>
    %cst_34 = arith.constant 1.000000e+00 : f32
    %119 = vector.broadcast %cst_34 : f32 to vector<16x128xf32>
    %120 = arith.subf %119, %118 : vector<16x128xf32>
    %cst_35 = arith.constant 5.000000e-01 : f32
    %121 = vector.broadcast %cst_35 : f32 to vector<16x128xf32>
    %122 = arith.mulf %120, %121 : vector<16x128xf32>
    %cst_36 = arith.constant 0.000000e+00 : f32
    %cst_37 = arith.constant 1.000000e+00 : f32
    %123 = vector.broadcast %cst_36 : f32 to vector<16x128xf32>
    %124 = arith.maximumf %123, %122 : vector<16x128xf32>
    %125 = vector.broadcast %cst_37 : f32 to vector<16x128xf32>
    %126 = arith.minimumf %125, %124 : vector<16x128xf32>
    %c0_38 = arith.constant 0 : index
    %c0_39 = arith.constant 0 : index
    %127 = vector.load %arg3[%c0_38, %c0_39] : memref<16x128xf32, #tpu.memory_space<vmem>>, vector<16x128xf32>
    tpu.vector_store %arg3[%c0_38, %c0_39], %126 {strides = array<i32>} : memref<16x128xf32, #tpu.memory_space<vmem>>, vector<16x128xf32>,
    return
  }
  func.func @transform_0(%arg0: i32) -> (i32, i32) {
    %c0_i32 = arith.constant 0 : i32
    %c0_i32_0 = arith.constant 0 : i32
    return %arg0, %c0_i32 : i32, i32
  }
  func.func @transform_1(%arg0: i32) -> (i32, i32) {
    %c0_i32 = arith.constant 0 : i32
    %c0_i32_0 = arith.constant 0 : i32
    return %arg0, %c0_i32 : i32, i32
  }
  func.func @transform_2(%arg0: i32) -> (i32, i32) {
    %c0_i32 = arith.constant 0 : i32
    %c0_i32_0 = arith.constant 0 : i32
    return %arg0, %c0_i32 : i32, i32
  }
}

</mosaic_0001>

<llo_original>
// kernel: tpu_custom_call.1
$region0: #{tpu_custom_call.1}
  #allocation0 [shape = 'u32[]', space=smem, size = 0x4, offset = 0x4, fixed_abs, tag = 'smem constant byte address 0x4 - core index']
  #allocation1 [shape = 'u32[144,128]{1,0:T(1,128)}', space=vmem, size = 0x12000, scoped, tag = 'internal scratch']
  %s0 = inlined_call_operand.hbm [shape: f32[128,128], index: 0, kind: input, shape index: {}]
  %s1 = inlined_call_operand.hbm [shape: f32[128,128], index: 1, kind: input, shape index: {}]
  %s2 = inlined_call_operand.hbm [shape: f32[128,128], index: 2, kind: output, shape index: {}]
  %s3 = sld [smem:[#allocation0]]
  $region49: #{tpu_custom_call.1} parent=0
    _
  %s5 = ssub.s32 1, %s3
  %s6 = scalar_select 0, %s5, %s3
  $region1: #{tpu_custom_call.1} parent=0
    #allocation2 [shape = 'u8[16384]{0}', space=vmem, size = 0x4000, scoped, tag = 'input window, operand 0']
    #allocation3 [shape = 's32[2]{0}', space=sflag, size = 0x8, scoped, tag = 'scoped memory for tpu_custom_call.1']
    #allocation4 [shape = 's32[2]{0}', space=sflag, size = 0x8, scoped, tag = 'scoped memory for tpu_custom_call.1']
    #allocation5 [shape = 'u8[16384]{0}', space=vmem, size = 0x4000, scoped, tag = 'input window, operand 1']
    #allocation6 [shape = 's32[2]{0}', space=sflag, size = 0x8, scoped, tag = 'scoped memory for tpu_custom_call.1']
    #allocation7 [shape = 'u8[16384]{0}', space=vmem, size = 0x4000, scoped, tag = 'output window, operand 0']
    %7 = vsyncpa [#allocation3], 0
    %s8 = scalar_lea.sflag [#allocation3], 1
    %9 = vsyncpa %s8, 0
    %10 = vsyncpa [#allocation6], 0
    %s11 = scalar_lea.sflag [#allocation6], 1
    %12 = vsyncpa %s11, 0
    %13 = vsyncpa [#allocation4], 0
    %s14 = scalar_lea.sflag [#allocation4], 1
    %15 = vsyncpa %s14, 0
    loop: start=0, step=1, limit=10
    $region2: #{tpu_custom_call.1} parent=1 // loop_pre_header
      _
    $region3: #{tpu_custom_call.1} parent=1 // loop_header
      %s17 = sphi 0, %s21
      %p18 = scmp.ge.s32.totalorder %s17, 10
      %s27 = sphi 0, %s29
      %s30 = sphi 0, %s27
      %s31 = sphi 0, %s30
      %s47 = sphi 0, %s31
      %s53 = sphi 0, %s55
      %s56 = sphi 0, %s53
      %s57 = sphi 0, %s56
      %s73 = sphi 0, %s57
      %s79 = sphi 0, %s81
      %s82 = sphi 0, %s79
      %s83 = sphi 0, %s82
      %s99 = sphi 0, %s83
    $region4: #{tpu_custom_call.1} parent=1 // loop_header_branch
      %20 = sbr.rel (%p18) target = $region8
    $region5: #{tpu_custom_call.1} parent=1 // loop_body
      %s22 = ssub.s32 %s17, 1
      %s23 = ssub.s32 %s17, 2
      %s24 = sadd.s32 %s17, 1
      %s25 = ssub.s32 %s17, %s24
      %p26 = scmp.eq.s32.totalorder %s25, 0
      %s28 = sadd.s32 %s27, 1
      %s29 = scalar_select %p26, %s27, %s28
      %p32 = pneg %p26
      %p33 = scmp.eq.s32.totalorder %s17, 7
      %p34 = por %p32, %p33
      %p35 = scmp.ne.s32.totalorder %s27, %s30
      %p36 = scmp.eq.s32.totalorder %s17, 0
      %p37 = por %p35, %p36
      %p38 = scmp.ne.s32.totalorder %s27, %s30
      %p39 = scmp.eq.s32.totalorder %s22, 7
      %p40 = por %p38, %p39
      %p41 = scmp.ne.s32.totalorder %s30, %s31
      %p42 = scmp.eq.s32.totalorder %s22, 0
      %p43 = por %p41, %p42
      %p44 = scmp.ne.s32.totalorder %s30, %s31
      %p45 = scmp.eq.s32.totalorder %s23, 7
      %p46 = por %p44, %p45
      %p48 = scmp.ne.s32.totalorder %s31, %s47
      %p49 = scmp.eq.s32.totalorder %s23, 0
      %p50 = por %p48, %p49
      %s51 = ssub.s32 %s17, %s24
      %p52 = scmp.eq.s32.totalorder %s51, 0
      %s54 = sadd.s32 %s53, 1
      %s55 = scalar_select %p52, %s53, %s54
      %p58 = pneg %p52
      %p59 = scmp.eq.s32.totalorder %s17, 7
      %p60 = por %p58, %p59
      %p61 = scmp.ne.s32.totalorder %s53, %s56
      %p62 = scmp.eq.s32.totalorder %s17, 0
      %p63 = por %p61, %p62
      %p64 = scmp.ne.s32.totalorder %s53, %s56
      %p65 = scmp.eq.s32.totalorder %s22, 7
      %p66 = por %p64, %p65
      %p67 = scmp.ne.s32.totalorder %s56, %s57
      %p68 = scmp.eq.s32.totalorder %s22, 0
      %p69 = por %p67, %p68
      %p70 = scmp.ne.s32.totalorder %s56, %s57
      %p71 = scmp.eq.s32.totalorder %s23, 7
      %p72 = por %p70, %p71
      %p74 = scmp.ne.s32.totalorder %s57, %s73
      %p75 = scmp.eq.s32.totalorder %s23, 0
      %p76 = por %p74, %p75
      %s77 = ssub.s32 %s17, %s24
      %p78 = scmp.eq.s32.totalorder %s77, 0
      %s80 = sadd.s32 %s79, 1
      %s81 = scalar_select %p78, %s79, %s80
      %p84 = pneg %p78
      %p85 = scmp.eq.s32.totalorder %s17, 7
      %p86 = por %p84, %p85
      %p87 = scmp.ne.s32.totalorder %s79, %s82
      %p88 = scmp.eq.s32.totalorder %s17, 0
      %p89 = por %p87, %p88
      %p90 = scmp.ne.s32.totalorder %s79, %s82
      %p91 = scmp.eq.s32.totalorder %s22, 7
      %p92 = por %p90, %p91
      %p93 = scmp.ne.s32.totalorder %s82, %s83
      %p94 = scmp.eq.s32.totalorder %s22, 0
      %p95 = por %p93, %p94
      %p96 = scmp.ne.s32.totalorder %s82, %s83
      %p97 = scmp.eq.s32.totalorder %s23, 7
      %p98 = por %p96, %p97
      %p100 = scmp.ne.s32.totalorder %s83, %s99
      %p101 = scmp.eq.s32.totalorder %s23, 0
      %p102 = por %p100, %p101
      %p103 = scmp.le.s32.totalorder 1, %s17
      %p104 = scmp.lt.s32.totalorder %s17, 9
      %p105 = pnand %p103, %p104
      %p106 = pneg %p105
      // Predicated region
      $region9: #{tpu_custom_call.1} parent=5 // pred_check
        _
      $region10: #{tpu_custom_call.1} parent=5 // pred_check_branch
        %108 = sbr.rel (%p105) target = $region12
      $region11: #{tpu_custom_call.1} parent=5 // pred_region
        %s109 = ssub.s32 %s17, 1
      $region12: #{tpu_custom_call.1} parent=5 // pred_fallthru
        _
      %p110 = scmp.lt.s32.totalorder %s17, 8
      // Predicated region
      $region13: #{tpu_custom_call.1} parent=5 // pred_check
        %p111 = pneg %p110
      $region14: #{tpu_custom_call.1} parent=5 // pred_check_branch
        %113 = sbr.rel (%p111) target = $region16
      $region15: #{tpu_custom_call.1} parent=5 // pred_region
        // Predicated region
        $region17: #{tpu_custom_call.1} parent=15 // pred_check
          %p114 = pneg %p37
        $region18: #{tpu_custom_call.1} parent=15 // pred_check_branch
          %116 = sbr.rel (%p114) target = $region20
        $region19: #{tpu_custom_call.1} parent=15 // pred_region
          %s117 = sand.u32 %s27, 1
          %s118 = scalar_lea.sflag [#allocation3], %s117
          %s119 = sand.u32 %s27, 1
          %s120 = smul.addr %s119, 16
          %s121 = scalar_lea.vmem [#allocation2], %s120
          %s122 = smul.u32 2, %s17
          %s124 = ssub.s32 256, 256
          %125 = vsyncadd %s118, %s124
          %s126 = smul.addr %s122, 128
          %s127 = scalar_lea.hbm %s0, %s126
          %s128 = sshll.u32 %s121, 4
          %s129 = int_to_ptr.vmem [resolvable:$true] %s128
          %134 = dma.hbm_to_vmem [thread:$0]  %s127, 256, %s129, %s118, 128, 128, 8
        $region20: #{tpu_custom_call.1} parent=15 // pred_fallthru
          _
        // Predicated region
        $region21: #{tpu_custom_call.1} parent=15 // pred_check
          %p135 = pneg %p63
        $region22: #{tpu_custom_call.1} parent=15 // pred_check_branch
          %137 = sbr.rel (%p135) target = $region24
        $region23: #{tpu_custom_call.1} parent=15 // pred_region
          %s138 = sand.u32 %s53, 1
          %s139 = scalar_lea.sflag [#allocation6], %s138
          %s140 = sand.u32 %s53, 1
          %s141 = smul.addr %s140, 16
          %s142 = scalar_lea.vmem [#allocation5], %s141
          %s143 = smul.u32 2, %s17
          %s145 = ssub.s32 256, 256
          %146 = vsyncadd %s139, %s145
          %s147 = smul.addr %s143, 128
          %s148 = scalar_lea.hbm %s1, %s147
          %s149 = sshll.u32 %s142, 4
          %s150 = int_to_ptr.vmem [resolvable:$true] %s149
          %155 = dma.hbm_to_vmem [thread:$0]  %s148, 256, %s150, %s139, 128, 128, 8
        $region24: #{tpu_custom_call.1} parent=15 // pred_fallthru
          _
      $region16: #{tpu_custom_call.1} parent=5 // pred_fallthru
        _
      %p156 = scmp.le.s32.totalorder 1, %s17
      %p157 = scmp.lt.s32.totalorder %s17, 9
      %p158 = pnand %p156, %p157
      %p159 = pneg %p158
      // Predicated region
      $region25: #{tpu_custom_call.1} parent=5 // pred_check
        _
      $region26: #{tpu_custom_call.1} parent=5 // pred_check_branch
        %161 = sbr.rel (%p158) target = $region28
      $region27: #{tpu_custom_call.1} parent=5 // pred_region
        %s162 = ssub.s32 %s17, 1
        %s163 = sand.u32 %s30, 1
        %s164 = scalar_lea.sflag [#allocation3], %s163
        %s165 = sand.u32 %s30, 1
        %s166 = smul.addr %s165, 16
        %s167 = scalar_lea.vmem [#allocation2], %s166
        // Predicated region
        $region29: #{tpu_custom_call.1} parent=27 // pred_check
          %p168 = pneg %p43
        $region30: #{tpu_custom_call.1} parent=27 // pred_check_branch
          %170 = sbr.rel (%p168) target = $region32
        $region31: #{tpu_custom_call.1} parent=27 // pred_region
          %171 = dma.done %s164, 256
        $region32: #{tpu_custom_call.1} parent=27 // pred_fallthru
          _
        %s172 = sand.u32 %s56, 1
        %s173 = scalar_lea.sflag [#allocation6], %s172
        %s174 = sand.u32 %s56, 1
        %s175 = smul.addr %s174, 16
        %s176 = scalar_lea.vmem [#allocation5], %s175
        // Predicated region
        $region33: #{tpu_custom_call.1} parent=27 // pred_check
          %p177 = pneg %p69
        $region34: #{tpu_custom_call.1} parent=27 // pred_check_branch
          %179 = sbr.rel (%p177) target = $region36
        $region35: #{tpu_custom_call.1} parent=27 // pred_region
          %180 = dma.done %s173, 256
        $region36: #{tpu_custom_call.1} parent=27 // pred_fallthru
          _
        %s181 = sand.u32 %s30, 1
        %s182 = scalar_lea.sflag [#allocation3], %s181
        %s183 = sand.u32 %s30, 1
        %s184 = smul.addr %s183, 16
        %s185 = scalar_lea.vmem [#allocation2], %s184
        %p186 = pneg %p43
        %p187 = pneg %p40
        %s188 = sand.u32 %s56, 1
        %s189 = scalar_lea.sflag [#allocation6], %s188
        %s190 = sand.u32 %s56, 1
        %s191 = smul.addr %s190, 16
        %s192 = scalar_lea.vmem [#allocation5], %s191
        %p193 = pneg %p69
        %p194 = pneg %p66
        %p195 = pneg %p95
        %p196 = pneg %p92
        %s197 = sand.u32 %s82, 1
        %s198 = scalar_lea.sflag [#allocation4], %s197
        %s199 = sand.u32 %s82, 1
        %s200 = smul.addr %s199, 16
        %s201 = scalar_lea.vmem [#allocation7], %s200
        %s202 = smul.u32 2, %s22
        %s203 = smul.u32 2, %s22
        %s204 = smul.u32 2, %s22
        %v205 = vld [vmem:[%s167] sm:$0xff]
        %v206 = vld [vmem:[%s167 + $0x8] sm:$0xff]
        %v207 = vld [vmem:[%s176] sm:$0xff]
        %v208 = vld [vmem:[%s176 + $0x8] sm:$0xff]
        %v209 = vlaneseq
        %v210 = vand.u32 %v209, 127
        %vm211 = vcmp.eq.s32.totalorder %v210, 0
        %vm212 = vcmp.eq.s32.totalorder %v210, 127
        %v213 = vlaneseq
        %v214 = vshrl.u32 %v213, 7
        %v215 = vadd.s32 %v214, 8
        %vm216 = vcmp.lt.s32.totalorder %v214, 0
        %v217 = vsub.s32 0, %v214
        %v218 = vsel %vm216, %v217, %v214
        %v219 = vshrl.u32 %v218, 4
        %v220 = vand.u32 %v218, 15
        %v221 = vsub.s32 0, %v220
        %v222 = vsel %vm216, %v221, %v220
        %vm223 = vcmp.lt.s32.totalorder %v215, 0
        %v224 = vsub.s32 0, %v215
        %v225 = vsel %vm223, %v224, %v215
        %v226 = vshrl.u32 %v225, 4
        %v227 = vand.u32 %v225, 15
        %v228 = vsub.s32 0, %v227
        %v229 = vsel %vm223, %v228, %v227
        %vm230 = vcmp.ne.s32.totalorder %v222, 0
        %vm231 = vcmp.ne.s32.totalorder %v229, 0
        %vm232 = vcmp.lt.s32.totalorder %v222, 0
        %vm233 = vcmp.lt.s32.totalorder %v229, 0
        %vm234 = vmand %vm232, %vm230
        %vm235 = vmand %vm233, %vm231
        %v236 = vadd.s32 %v222, 16
        %v237 = vadd.s32 %v229, 16
        %v238 = vsel %vm234, %v236, %v222
        %v239 = vsel %vm235, %v237, %v229
        %vm240 = vcmp.eq.s32.totalorder %v238, 0
        %vm241 = vcmp.eq.s32.totalorder %v239, 0
        %vm242 = vcmp.eq.s32.totalorder %v238, 15
        %vm243 = vcmp.eq.s32.totalorder %v239, 15
        %244 = vrot.lane.b32.xlu0 %v205, 1
        %v245 = vpop.permute.xlu0 %244
        %246 = vrot.lane.b32.xlu0 %v206, 1
        %v247 = vpop.permute.xlu0 %246
        %248 = vrot.lane.b32.xlu0 %v205, 127
        %v249 = vpop.permute.xlu0 %248
        %250 = vrot.lane.b32.xlu0 %v206, 127
        %v251 = vpop.permute.xlu0 %250
        %v252 = vsel %vm211, %v249, %v245
        %v253 = vsel %vm211, %v251, %v247
        %v254 = vadd.f32 %v205, %v252
        %v255 = vadd.f32 %v206, %v253
        %v256 = vsel %vm212, %v245, %v249
        %v257 = vsel %vm212, %v247, %v251
        %v258 = vadd.f32 %v254, %v256
        %v259 = vadd.f32 %v255, %v257
        %v260 = vrot.slane %v258, 7
        %v261 = vrot.slane %v259, 7
        %vm262 = vcmp.lt.s32.totalorder %v214, 1
        %v263 = vsel %vm262, %v260, %v261
        %v264 = vsel %vm262, %v261, %v260
        %v265 = vrot.slane %v258, 1
        %v266 = vrot.slane %v259, 1
        %vm267 = vcmp.lt.s32.totalorder %v214, 7
        %v268 = vsel %vm267, %v265, %v266
        %v269 = vsel %vm267, %v266, %v265
        %v270 = vsel %vm240, %v268, %v264
        %v271 = vsel %vm241, %v269, %v263
        %v272 = vadd.f32 %v258, %v270
        %v273 = vadd.f32 %v259, %v271
        %v274 = vsel %vm242, %v264, %v268
        %v275 = vsel %vm243, %v263, %v269
        %v276 = vadd.f32 %v272, %v274
        %v277 = vadd.f32 %v273, %v275
        %278 = vrot.lane.b32.xlu0 %v207, 1
        %v279 = vpop.permute.xlu0 %278
        %280 = vrot.lane.b32.xlu0 %v208, 1
        %v281 = vpop.permute.xlu0 %280
        %282 = vrot.lane.b32.xlu0 %v207, 127
        %v283 = vpop.permute.xlu0 %282
        %284 = vrot.lane.b32.xlu0 %v208, 127
        %v285 = vpop.permute.xlu0 %284
        %v286 = vsel %vm211, %v283, %v279
        %v287 = vsel %vm211, %v285, %v281
        %v288 = vadd.f32 %v207, %v286
        %v289 = vadd.f32 %v208, %v287
        %v290 = vsel %vm212, %v279, %v283
        %v291 = vsel %vm212, %v281, %v285
        %v292 = vadd.f32 %v288, %v290
        %v293 = vadd.f32 %v289, %v291
        %v294 = vrot.slane %v292, 7
        %v295 = vrot.slane %v293, 7
        %v296 = vsel %vm262, %v294, %v295
        %v297 = vsel %vm262, %v295, %v294
        %v298 = vrot.slane %v292, 1
        %v299 = vrot.slane %v293, 1
        %v300 = vsel %vm267, %v298, %v299
        %v301 = vsel %vm267, %v299, %v298
        %v302 = vsel %vm240, %v300, %v297
        %v303 = vsel %vm241, %v301, %v296
        %v304 = vadd.f32 %v292, %v302
        %v305 = vadd.f32 %v293, %v303
        %v306 = vsel %vm242, %v297, %v300
        %v307 = vsel %vm243, %v296, %v301
        %v308 = vadd.f32 %v304, %v306
        %v309 = vadd.f32 %v305, %v307
        %v310 = vmul.f32 %v276, %v308
        %v311 = vmul.f32 %v277, %v309
        %v312 = vadd.f32 %v310, %v310
        %v313 = vadd.f32 %v311, %v311
        %v314 = vadd.f32 %v312, 0.0081
        %v315 = vadd.f32 %v313, 0.0081
        %v316 = vmul.f32 %v205, %v207
        %v317 = vmul.f32 %v206, %v208
        %318 = vrot.lane.b32.xlu0 %v316, 1
        %v319 = vpop.permute.xlu0 %318
        %320 = vrot.lane.b32.xlu0 %v317, 1
        %v321 = vpop.permute.xlu0 %320
        %322 = vrot.lane.b32.xlu0 %v316, 127
        %v323 = vpop.permute.xlu0 %322
        %324 = vrot.lane.b32.xlu0 %v317, 127
        %v325 = vpop.permute.xlu0 %324
        %v326 = vsel %vm211, %v323, %v319
        %v327 = vsel %vm211, %v325, %v321
        %v328 = vadd.f32 %v316, %v326
        %v329 = vadd.f32 %v317, %v327
        %v330 = vsel %vm212, %v319, %v323
        %v331 = vsel %vm212, %v321, %v325
        %v332 = vadd.f32 %v328, %v330
        %v333 = vadd.f32 %v329, %v331
        %v334 = vrot.slane %v332, 7
        %v335 = vrot.slane %v333, 7
        %v336 = vsel %vm262, %v334, %v335
        %v337 = vsel %vm262, %v335, %v334
        %v338 = vrot.slane %v332, 1
        %v339 = vrot.slane %v333, 1
        %v340 = vsel %vm267, %v338, %v339
        %v341 = vsel %vm267, %v339, %v338
        %v342 = vsel %vm240, %v340, %v337
        %v343 = vsel %vm241, %v341, %v336
        %v344 = vadd.f32 %v332, %v342
        %v345 = vadd.f32 %v333, %v343
        %v346 = vsel %vm242, %v337, %v340
        %v347 = vsel %vm243, %v336, %v341
        %v348 = vadd.f32 %v344, %v346
        %v349 = vadd.f32 %v345, %v347
        %v350 = vmul.f32 %v348, 18.0
        %v351 = vmul.f32 %v349, 18.0
        %v352 = vsub.f32 %v350, %v312
        %v353 = vsub.f32 %v351, %v313
        %v354 = vadd.f32 %v352, 0.0729
        %v355 = vadd.f32 %v353, 0.0729
        %v356 = vmul.f32 %v314, %v354
        %v357 = vmul.f32 %v315, %v355
        %v358 = vmul.f32 %v276, %v276
        %v359 = vmul.f32 %v277, %v277
        %v360 = vmul.f32 %v308, %v308
        %v361 = vmul.f32 %v309, %v309
        %v362 = vadd.f32 %v358, %v360
        %v363 = vadd.f32 %v359, %v361
        %v364 = vadd.f32 %v362, 0.0081
        %v365 = vadd.f32 %v363, 0.0081
        %v366 = vmul.f32 %v205, %v205
        %v367 = vmul.f32 %v206, %v206
        %368 = vrot.lane.b32.xlu0 %v366, 1
        %v369 = vpop.permute.xlu0 %368
        %370 = vrot.lane.b32.xlu0 %v367, 1
        %v371 = vpop.permute.xlu0 %370
        %372 = vrot.lane.b32.xlu0 %v366, 127
        %v373 = vpop.permute.xlu0 %372
        %374 = vrot.lane.b32.xlu0 %v367, 127
        %v375 = vpop.permute.xlu0 %374
        %v376 = vsel %vm211, %v373, %v369
        %v377 = vsel %vm211, %v375, %v371
        %v378 = vadd.f32 %v366, %v376
        %v379 = vadd.f32 %v367, %v377
        %v380 = vsel %vm212, %v369, %v373
        %v381 = vsel %vm212, %v371, %v375
        %v382 = vadd.f32 %v378, %v380
        %v383 = vadd.f32 %v379, %v381
        %v384 = vrot.slane %v382, 7
        %v385 = vrot.slane %v383, 7
        %v386 = vsel %vm262, %v384, %v385
        %v387 = vsel %vm262, %v385, %v384
        %v388 = vrot.slane %v382, 1
        %v389 = vrot.slane %v383, 1
        %v390 = vsel %vm267, %v388, %v389
        %v391 = vsel %vm267, %v389, %v388
        %v392 = vsel %vm240, %v390, %v387
        %v393 = vsel %vm241, %v391, %v386
        %v394 = vadd.f32 %v382, %v392
        %v395 = vadd.f32 %v383, %v393
        %v396 = vsel %vm242, %v387, %v390
        %v397 = vsel %vm243, %v386, %v391
        %v398 = vadd.f32 %v394, %v396
        %v399 = vadd.f32 %v395, %v397
        %v400 = vmul.f32 %v207, %v207
        %v401 = vmul.f32 %v208, %v208
        %402 = vrot.lane.b32.xlu0 %v400, 1
        %v403 = vpop.permute.xlu0 %402
        %404 = vrot.lane.b32.xlu0 %v401, 1
        %v405 = vpop.permute.xlu0 %404
        %406 = vrot.lane.b32.xlu0 %v400, 127
        %v407 = vpop.permute.xlu0 %406
        %408 = vrot.lane.b32.xlu0 %v401, 127
        %v409 = vpop.permute.xlu0 %408
        %v410 = vsel %vm211, %v407, %v403
        %v411 = vsel %vm211, %v409, %v405
        %v412 = vadd.f32 %v400, %v410
        %v413 = vadd.f32 %v401, %v411
        %v414 = vsel %vm212, %v403, %v407
        %v415 = vsel %vm212, %v405, %v409
        %v416 = vadd.f32 %v412, %v414
        %v417 = vadd.f32 %v413, %v415
        %v418 = vrot.slane %v416, 7
        %v419 = vrot.slane %v417, 7
        %v420 = vsel %vm262, %v418, %v419
        %v421 = vsel %vm262, %v419, %v418
        %v422 = vrot.slane %v416, 1
        %v423 = vrot.slane %v417, 1
        %v424 = vsel %vm267, %v422, %v423
        %v425 = vsel %vm267, %v423, %v422
        %v426 = vsel %vm240, %v424, %v421
        %v427 = vsel %vm241, %v425, %v420
        %v428 = vadd.f32 %v416, %v426
        %v429 = vadd.f32 %v417, %v427
        %v430 = vsel %vm242, %v421, %v424
        %v431 = vsel %vm243, %v420, %v425
        %v432 = vadd.f32 %v428, %v430
        %v433 = vadd.f32 %v429, %v431
        %v434 = vadd.f32 %v398, %v432
        %v435 = vadd.f32 %v399, %v433
        %v436 = vmul.f32 %v434, 9.0
        %v437 = vmul.f32 %v435, 9.0
        %v438 = vsub.f32 %v436, %v362
        %v439 = vsub.f32 %v437, %v363
        %v440 = vadd.f32 %v438, 0.0729
        %v441 = vadd.f32 %v439, 0.0729
        %v442 = vmul.f32 %v364, %v440
        %v443 = vmul.f32 %v365, %v441
        %v444 = vrcp.pop %v442
        %v445 = vrcp.pop %v443
        %v446 = vmul.f32 %v442, %v444
        %v447 = vmul.f32 %v443, %v445
        %v448 = vsub.f32 2.0, %v446
        %v449 = vsub.f32 2.0, %v447
        %v450 = vmul.f32 %v444, %v448
        %v451 = vmul.f32 %v445, %v449
        %v452 = vmul.f32 %v356, %v450
        %v453 = vmul.f32 %v357, %v451
        %v454 = vsub.f32 1.0, %v452
        %v455 = vsub.f32 1.0, %v453
        %v456 = vmul.f32 %v454, 0.5
        %v457 = vmul.f32 %v455, 0.5
        %v458 = vmax.f32 %v456, 0.0
        %v459 = vmax.f32 %v457, 0.0
        %v460 = vmin.f32 %v458, 1.0
        %v461 = vmin.f32 %v459, 1.0
        %462 = vst [vmem:[%s201] sm:$0xff] %v460
        %463 = vst [vmem:[%s201 + $0x8] sm:$0xff] %v461
        %s464 = sand.u32 %s82, 1
        %s465 = scalar_lea.sflag [#allocation4], %s464
        %s466 = sand.u32 %s82, 1
        %s467 = smul.addr %s466, 16
        %s468 = scalar_lea.vmem [#allocation7], %s467
        // Predicated region
        $region37: #{tpu_custom_call.1} parent=27 // pred_check
          %p469 = pneg %p92
        $region38: #{tpu_custom_call.1} parent=27 // pred_check_branch
          %471 = sbr.rel (%p469) target = $region40
        $region39: #{tpu_custom_call.1} parent=27 // pred_region
          %s472 = smul.u32 2, %s22
          %s474 = ssub.s32 256, 256
          %475 = vsyncadd %s465, %s474
          %s476 = smul.addr %s472, 128
          %s477 = scalar_lea.hbm %s2, %s476
          %s478 = sshll.u32 %s468, 4
          %s479 = int_to_ptr.vmem [resolvable:$true] %s478
          %484 = dma.vmem_to_hbm [thread:$0]  %s479, 256, %s477, %s465, 128, 128, 8
        $region40: #{tpu_custom_call.1} parent=27 // pred_fallthru
          _
      $region28: #{tpu_custom_call.1} parent=5 // pred_fallthru
        _
      %p485 = scmp.le.s32.totalorder 2, %s17
      // Predicated region
      $region41: #{tpu_custom_call.1} parent=5 // pred_check
        %p486 = pneg %p485
      $region42: #{tpu_custom_call.1} parent=5 // pred_check_branch
        %488 = sbr.rel (%p486) target = $region44
      $region43: #{tpu_custom_call.1} parent=5 // pred_region
        %s489 = ssub.s32 %s17, 2
        // Predicated region
        $region45: #{tpu_custom_call.1} parent=43 // pred_check
          %p490 = pneg %p98
        $region46: #{tpu_custom_call.1} parent=43 // pred_check_branch
          %492 = sbr.rel (%p490) target = $region48
        $region47: #{tpu_custom_call.1} parent=43 // pred_region
          %s493 = sand.u32 %s83, 1
          %s494 = scalar_lea.sflag [#allocation4], %s493
          %s495 = sand.u32 %s83, 1
          %s496 = smul.addr %s495, 16
          %s497 = scalar_lea.vmem [#allocation7], %s496
          %498 = dma.done %s494, 256
        $region48: #{tpu_custom_call.1} parent=43 // pred_fallthru
          _
      $region44: #{tpu_custom_call.1} parent=5 // pred_fallthru
        _
    $region6: #{tpu_custom_call.1} parent=1 // loop_footer
      %s21 = sadd.s32 1, %s17
    $region7: #{tpu_custom_call.1} parent=1 // loop_footer_branch
      %16 = sbr.rel target = $region3
    $region8: #{tpu_custom_call.1} parent=1 // loop_exit
      _
    %499 = vsyncpa [#allocation3], 1
    %s500 = scalar_lea.sflag [#allocation3], 1
    %501 = vsyncpa %s500, 1
    %502 = vsyncpa [#allocation6], 1
    %s503 = scalar_lea.sflag [#allocation6], 1
    %504 = vsyncpa %s503, 1
    %505 = vsyncpa [#allocation4], 1
    %s506 = scalar_lea.sflag [#allocation4], 1
    %507 = vsyncpa %s506, 1

</llo_original>
